<compile_context>
chip_gen: v6e
topology: v6e:2x2x1
jax: 0.10.0
libtpu: 0.0.40
codegen_flags: <defaults>
</compile_context>

<pallas_src>
import jax
import jax.numpy as jnp
from jax.experimental import pallas as pl
from jax.experimental.pallas import tpu as pltpu


def _round_up(x: int, m: int) -> int:
    return ((x + m - 1) // m) * m


def _as_kernel_dtype(a):
    """Keep f32/bf16 as-is (bf16 halves HBM traffic); cast everything else."""
    a = jnp.asarray(a)
    if a.dtype == jnp.float32 or a.dtype == jnp.bfloat16:
        return a
    return a.astype(jnp.float32)


def _pick_block_rows(r: int, requested: int) -> int:
    """Rows (of the flat (R,128) view) per grid step.

    Multiples of 16 (safe for bf16 sublane packing), as large as requested but
    not larger than the array, and split in two when a single block would
    cover everything and there is enough data (keeps both v7x TCs busy).
    """
    tr = min(int(requested), (r // 16) * 16) if r >= 16 else 16
    tr = max(16, (tr // 16) * 16)
    if tr >= r and r > 32:
        tr = max(16, _round_up((r + 1) // 2, 16))
    return tr


def _make_directional_loss_kernel(r_valid: int, block_rows: int):
    """Kernel over (block_rows, 128) lane-interleaved views of [B, 4] data.

    Lane l of every row holds component c = l % 4 of some batch element:
      c == 0, 1, 2 : direction logits / soft labels
      c == 3       : movement prediction / movement target
    """
    need_row_mask = (r_valid % block_rows) != 0

    def kernel(pred_ref, tgt_ref, out_ref):
        x = pred_ref[...].astype(jnp.float32)   # (TR, 128)
        t = tgt_ref[...].astype(jnp.float32)    # (TR, 128)

        # XLU lane rotations aligning components 1..3 onto the c == 0 lanes.
        # pltpu.roll matches np.roll: a positive shift moves data toward
        # higher lane indices, so shift = 128 - c brings lane (l + c) to l.
        x1 = pltpu.roll(x, 127, axis=1)
        x2 = pltpu.roll(x, 126, axis=1)
        x3 = pltpu.roll(x, 125, axis=1)
        t1 = pltpu.roll(t, 127, axis=1)
        t2 = pltpu.roll(t, 126, axis=1)
        t3 = pltpu.roll(t, 125, axis=1)

        # On lanes l % 4 == 0: (x, x1, x2) are the 3 direction logits and x3
        # is the movement prediction (same for the target).  Other lanes
        # compute garbage that is masked out below.  Everything is pairwise
        # VPU/EUP work — no cross-sublane reductions on the hot path.
        m = jnp.maximum(jnp.maximum(x, x1), x2)
        e0 = jnp.exp(x - m)
        e1 = jnp.exp(x1 - m)
        e2 = jnp.exp(x2 - m)
        lse = m + jnp.log(e0 + e1 + e2)                     # logsumexp(3)
        ce = -(t * (x - lse) + t1 * (x1 - lse) + t2 * (x2 - lse))
        diff = x3 - t3
        mse = diff * diff

        # Keep only the c == 0 lanes; additionally mask rows past the real
        # extent when the last grid block is ragged.  jnp.where is a select,
        # so NaN/Inf from out-of-bounds garbage cannot leak into the sums.
        lane = jax.lax.broadcasted_iota(jnp.int32, x.shape, 1)
        valid = (lane & 3) == 0
        if need_row_mask:
            row = jax.lax.broadcasted_iota(jnp.int32, x.shape, 0)
            valid = jnp.logical_and(
                valid, pl.program_id(0) * block_rows + row < r_valid)
        ce = jnp.where(valid, ce, 0.0)
        mse = jnp.where(valid, mse, 0.0)

        # Sublane-only reduction; lane-dense (unmasked) stores of the
        # per-tile partials.  Final lane/tile reduction happens in the wrapper.
        out_ref[0, 0:1, :] = jnp.sum(ce, axis=0, keepdims=True)
        out_ref[0, 1:2, :] = jnp.sum(mse, axis=0, keepdims=True)

    return kernel


def directional_loss(pred, target, current_price=None, *, alpha=0.5, beta=0.5,
                     block_rows=2048, min_pallas_batch=2048):
    """Pallas equivalent of DirectionalLoss.forward(pred, target, current_price).

    pred:   [B, 4] float  (3 direction logits + 1 movement prediction)
    target: [B, 4] float  (3 soft direction labels + 1 movement target)
            or [B, 3] float (soft direction labels only -> movement target = 0)
    """
    del current_price  # unused in the reference forward pass
    pred = _as_kernel_dtype(pred)
    target = _as_kernel_dtype(target)
    B = int(pred.shape[0])
    alpha = float(alpha)
    beta = float(beta)

    # Small batches: a single Pallas tile is pure fixed overhead; let XLA fuse.
    if B < int(min_pallas_batch):
        return _reference_loss(pred, target, alpha, beta)

    # Zero-copy view: contiguous [B, 4] -> [B*4//128, 128] (row-major reshape
    # is free).  Row padding is only needed when B % 32 != 0 (and up to a 512
    # minimum so blocks are well formed); the missing movement-target column
    # is padded with zeros for [B, 3] targets.  Zero-padded rows contribute
    # exactly 0 to both partial sums (zero logits with zero soft labels).
    # TODO(synk): if the producer guarantees B % 32 == 0 and 4-column targets,
    # both pads vanish and the whole path is fully zero-copy.
    b_pad = max(_round_up(B, 32), 512)
    if b_pad != B:
        pred = jnp.pad(pred, ((0, b_pad - B), (0, 0)))
    t_cols = int(target.shape[1])
    if t_cols == 4 and b_pad == B:
        tgt = target
    else:
        tgt = jnp.pad(target, ((0, b_pad - B), (0, 4 - t_cols)))

    r = (b_pad * 4) // 128             # rows of the flat (R, 128) view
    pred_flat = pred.reshape(r, 128)
    tgt_flat = tgt.reshape(r, 128)

    tr = _pick_block_rows(r, block_rows)
    g = pl.cdiv(r, tr)

    kernel = _make_directional_loss_kernel(r, tr)
    partials = pl.pallas_call(
        kernel,
        out_shape=jax.ShapeDtypeStruct((g, 2, 128), jnp.float32),
        grid=(g,),
        in_specs=[
            pl.BlockSpec((tr, 128), lambda i: (i, 0)),
            pl.BlockSpec((tr, 128), lambda i: (i, 0)),
        ],
        out_specs=pl.BlockSpec((1, 2, 128), lambda i: (i, 0, 0)),
        compiler_params=pltpu.CompilerParams(
            dimension_semantics=("parallel",),   # tiles independent -> both v7x TCs
            vmem_limit_bytes=32 * 1024 * 1024,
        ),
    )(pred_flat, tgt_flat)

    # Tiny two-level finalize in the wrapper (divide by the *real* batch size).
    inv_b = jnp.float32(1.0 / B)
    ce_total = jnp.sum(partials[:, 0, :])
    mse_total = jnp.sum(partials[:, 1, :])
    return (jnp.float32(alpha) * ce_total * inv_b
            + jnp.float32(beta) * mse_total * inv_b)


def _reference_loss(pred, target, alpha=0.5, beta=0.5):
    """Pure-JAX reference mirroring torch semantics (soft-label CE + MSE)."""
    pred = jnp.asarray(pred, jnp.float32)
    target = jnp.asarray(target, jnp.float32)
    pred_dir, pred_mov = pred[:, :3], pred[:, 3]
    if target.shape[1] == 4:
        tgt_dir, tgt_mov = target[:, :3], target[:, 3]
    else:
        tgt_dir, tgt_mov = target, jnp.zeros_like(pred_mov)
    logp = jax.nn.log_softmax(pred_dir, axis=-1)
    ce = jnp.mean(-jnp.sum(tgt_dir * logp, axis=-1))
    mse = jnp.mean((pred_mov - tgt_mov) ** 2)
    return alpha * ce + beta * mse


if __name__ == "__main__":
    key = jax.random.PRNGKey(0)
    k1, k2, k3 = jax.random.split(key, 3)

    # Case 1: B multiple of 32 (fully zero-copy path), 4-column target,
    # small block_rows so the grid has 2 steps.
    B1 = 1024
    pred1 = jax.random.normal(k1, (B1, 4), dtype=jnp.float32)
    tgt_dir1 = jax.nn.softmax(
        jax.random.normal(k2, (B1, 3), dtype=jnp.float32), axis=-1)
    tgt_mov1 = jax.random.normal(k3, (B1, 1), dtype=jnp.float32)
    target1 = jnp.concatenate([tgt_dir1, tgt_mov1], axis=1)      # [B, 4]
    price1 = jnp.ones((B1,), jnp.float32)  # unused, API parity only

    loss1 = jax.block_until_ready(
        directional_loss(pred1, target1, price1, alpha=0.5, beta=0.5,
                         block_rows=16, min_pallas_batch=0))
    ref1 = _reference_loss(pred1, target1, 0.5, 0.5)
    assert jnp.allclose(loss1, ref1, rtol=1e-4, atol=1e-5), (loss1, ref1)

    # Case 2: ragged batch (B % 32 != 0) + 3-column soft-label target
    # (movement target == 0) -> exercises row/column padding and the in-kernel
    # ragged-tail mask (grid of 3 with a partial last block).
    B2 = 1272
    pred2 = jax.random.normal(k2, (B2, 4), dtype=jnp.float32)
    tgt_dir2 = jax.nn.softmax(
        jax.random.normal(k3, (B2, 3), dtype=jnp.float32), axis=-1)
    price2 = jnp.ones((B2,), jnp.float32)

    loss2 = jax.block_until_ready(
        directional_loss(pred2, tgt_dir2, price2, alpha=0.5, beta=0.5,
                         block_rows=16, min_pallas_batch=0))
    ref2 = _reference_loss(pred2, tgt_dir2, 0.5, 0.5)
    assert jnp.allclose(loss2, ref2, rtol=1e-4, atol=1e-5), (loss2, ref2)

    # Case 3: bf16 inputs (half the HBM bytes), f32 accumulation in-kernel.
    pred3 = pred1.astype(jnp.bfloat16)
    target3 = target1.astype(jnp.bfloat16)
    loss3 = jax.block_until_ready(
        directional_loss(pred3, target3, price1, alpha=0.5, beta=0.5,
                         min_pallas_batch=0))
    ref3 = _reference_loss(pred3.astype(jnp.float32),
                           target3.astype(jnp.float32), 0.5, 0.5)
    assert jnp.allclose(loss3, ref3, rtol=1e-3, atol=1e-4), (loss3, ref3)

    print("KERNEL_OK")
</pallas_src>

<mosaic_0001>
module attributes {stable_mosaic.version = 11 : i64} {
  func.func @kernel(%arg0: i32, %arg1: memref<16x128xf32, #tpu.memory_space<vmem>>, %arg2: memref<16x128xf32, #tpu.memory_space<vmem>>, %arg3: memref<1x2x128xf32, #tpu.memory_space<vmem>>) attributes {dimension_semantics = [#tpu.dimension_semantics<parallel>], iteration_bounds = array<i64: 2>, scalar_prefetch = 0 : i64, scratch_operands = 0 : i64, tpu.core_type = #tpu.core_type<tc>, window_params = [{transform_indices = @transform_0, window_bounds = array<i64: 16, 128>}, {transform_indices = @transform_1, window_bounds = array<i64: 16, 128>}, {transform_indices = @transform_2, window_bounds = array<i64: 1, 2, 128>}]} {
    %c0 = arith.constant 0 : index
    %c0_0 = arith.constant 0 : index
    %0 = vector.load %arg1[%c0, %c0_0] : memref<16x128xf32, #tpu.memory_space<vmem>>, vector<16x128xf32>
    %c0_1 = arith.constant 0 : index
    %c0_2 = arith.constant 0 : index
    %1 = vector.load %arg2[%c0_1, %c0_2] : memref<16x128xf32, #tpu.memory_space<vmem>>, vector<16x128xf32>
    %c127_i32 = arith.constant 127 : i32
    %2 = tpu.dynamic_rotate %0 by %c127_i32 dim 1 : vector<16x128xf32>, i32 -> vector<16x128xf32>
    %c126_i32 = arith.constant 126 : i32
    %3 = tpu.dynamic_rotate %0 by %c126_i32 dim 1 : vector<16x128xf32>, i32 -> vector<16x128xf32>
    %c125_i32 = arith.constant 125 : i32
    %4 = tpu.dynamic_rotate %0 by %c125_i32 dim 1 : vector<16x128xf32>, i32 -> vector<16x128xf32>
    %c127_i32_3 = arith.constant 127 : i32
    %5 = tpu.dynamic_rotate %1 by %c127_i32_3 dim 1 : vector<16x128xf32>, i32 -> vector<16x128xf32>
    %c126_i32_4 = arith.constant 126 : i32
    %6 = tpu.dynamic_rotate %1 by %c126_i32_4 dim 1 : vector<16x128xf32>, i32 -> vector<16x128xf32>
    %c125_i32_5 = arith.constant 125 : i32
    %7 = tpu.dynamic_rotate %1 by %c125_i32_5 dim 1 : vector<16x128xf32>, i32 -> vector<16x128xf32>
    %8 = arith.maximumf %0, %2 : vector<16x128xf32>
    %9 = arith.maximumf %8, %3 : vector<16x128xf32>
    %10 = arith.subf %0, %9 : vector<16x128xf32>
    %11 = math.exp %10 : vector<16x128xf32>
    %12 = arith.subf %2, %9 : vector<16x128xf32>
    %13 = math.exp %12 : vector<16x128xf32>
    %14 = arith.subf %3, %9 : vector<16x128xf32>
    %15 = math.exp %14 : vector<16x128xf32>
    %16 = arith.addf %11, %13 : vector<16x128xf32>
    %17 = arith.addf %16, %15 : vector<16x128xf32>
    %18 = math.log %17 : vector<16x128xf32>
    %19 = arith.addf %9, %18 : vector<16x128xf32>
    %20 = arith.subf %0, %19 : vector<16x128xf32>
    %21 = arith.mulf %1, %20 : vector<16x128xf32>
    %22 = arith.subf %2, %19 : vector<16x128xf32>
    %23 = arith.mulf %5, %22 : vector<16x128xf32>
    %24 = arith.addf %21, %23 : vector<16x128xf32>
    %25 = arith.subf %3, %19 : vector<16x128xf32>
    %26 = arith.mulf %6, %25 : vector<16x128xf32>
    %27 = arith.addf %24, %26 : vector<16x128xf32>
    %cst = arith.constant 0.000000e+00 : f32
    %28 = vector.broadcast %cst : f32 to vector<16x128xf32>
    %29 = arith.subf %28, %27 : vector<16x128xf32>
    %30 = arith.subf %4, %7 : vector<16x128xf32>
    %31 = arith.mulf %30, %30 : vector<16x128xf32>
    %32 = tpu.iota {dimensions = array<i32: 1>} : vector<16x128xi32>
    %c3_i32 = arith.constant 3 : i32
    %33 = vector.broadcast %c3_i32 : i32 to vector<16x128xi32>
    %34 = arith.andi %32, %33 : vector<16x128xi32>
    %c0_i32 = arith.constant 0 : i32
    %35 = vector.broadcast %c0_i32 : i32 to vector<16x128xi32>
    %36 = arith.cmpi eq, %34, %35 : vector<16x128xi32>
    %cst_6 = arith.constant 0.000000e+00 : f32
    %37 = vector.broadcast %cst_6 : f32 to vector<16x128xf32>
    %38 = arith.select %36, %29, %37 : vector<16x128xi1>, vector<16x128xf32>
    %cst_7 = arith.constant 0.000000e+00 : f32
    %39 = vector.broadcast %cst_7 : f32 to vector<16x128xf32>
    %40 = arith.select %36, %31, %39 : vector<16x128xi1>, vector<16x128xf32>
    %cst_8 = arith.constant dense<0.000000e+00> : vector<128xf32>
    %41 = vector.multi_reduction <add>, %38, %cst_8 [0] : vector<16x128xf32> to vector<128xf32>
    %42 = vector.shape_cast %41 : vector<128xf32> to vector<1x128xf32>
    %c0_9 = arith.constant 0 : index
    %c0_10 = arith.constant 0 : index
    %c0_11 = arith.constant 0 : index
    %43 = vector.load %arg3[%c0_9, %c0_10, %c0_11] : memref<1x2x128xf32, #tpu.memory_space<vmem>>, vector<1x1x128xf32>
    %44 = vector.shape_cast %43 : vector<1x1x128xf32> to vector<1x128xf32>
    %45 = vector.shape_cast %42 : vector<1x128xf32> to vector<1x1x128xf32>
    tpu.vector_store %arg3[%c0_9, %c0_10, %c0_11], %45 {strides = array<i32>} : memref<1x2x128xf32, #tpu.memory_space<vmem>>, vector<1x1x128xf32>,
    %cst_12 = arith.constant dense<0.000000e+00> : vector<128xf32>
    %46 = vector.multi_reduction <add>, %40, %cst_12 [0] : vector<16x128xf32> to vector<128xf32>
    %47 = vector.shape_cast %46 : vector<128xf32> to vector<1x128xf32>
    %c0_13 = arith.constant 0 : index
    %c1 = arith.constant 1 : index
    %c0_14 = arith.constant 0 : index
    %48 = vector.load %arg3[%c0_13, %c1, %c0_14] : memref<1x2x128xf32, #tpu.memory_space<vmem>>, vector<1x1x128xf32>
    %49 = vector.shape_cast %48 : vector<1x1x128xf32> to vector<1x128xf32>
    %50 = vector.shape_cast %47 : vector<1x128xf32> to vector<1x1x128xf32>
    tpu.vector_store %arg3[%c0_13, %c1, %c0_14], %50 {strides = array<i32>} : memref<1x2x128xf32, #tpu.memory_space<vmem>>, vector<1x1x128xf32>,
    return
  }
  func.func @transform_0(%arg0: i32) -> (i32, i32) {
    %c0_i32 = arith.constant 0 : i32
    %c0_i32_0 = arith.constant 0 : i32
    return %arg0, %c0_i32 : i32, i32
  }
  func.func @transform_1(%arg0: i32) -> (i32, i32) {
    %c0_i32 = arith.constant 0 : i32
    %c0_i32_0 = arith.constant 0 : i32
    return %arg0, %c0_i32 : i32, i32
  }
  func.func @transform_2(%arg0: i32) -> (i32, i32, i32) {
    %c0_i32 = arith.constant 0 : i32
    %c0_i32_0 = arith.constant 0 : i32
    %c0_i32_1 = arith.constant 0 : i32
    return %arg0, %c0_i32, %c0_i32_0 : i32, i32, i32
  }
}

</mosaic_0001>

<llo_original>
// kernel: tpu_custom_call.1
$region0: #{tpu_custom_call.1}
  #allocation0 [shape = 'u32[]', space=smem, size = 0x4, offset = 0x4, fixed_abs, tag = 'smem constant byte address 0x4 - core index']
  #allocation1 [shape = 'u32[144,128]{1,0:T(1,128)}', space=vmem, size = 0x12000, scoped, tag = 'internal scratch']
  %s0 = inlined_call_operand.hbm [shape: f32[32,128], index: 0, kind: input, shape index: {}]
  %s1 = inlined_call_operand.hbm [shape: f32[32,128], index: 1, kind: input, shape index: {}]
  %s2 = inlined_call_operand.hbm [shape: f32[2,2,128], index: 2, kind: output, shape index: {}]
  %s3 = sld [smem:[#allocation0]]
  $region49: #{tpu_custom_call.1} parent=0
    _
  %s5 = ssub.s32 1, %s3
  %s6 = scalar_select 0, %s5, %s3
  $region1: #{tpu_custom_call.1} parent=0
    #allocation2 [shape = 'u8[16384]{0}', space=vmem, size = 0x4000, scoped, tag = 'input window, operand 0']
    #allocation3 [shape = 's32[2]{0}', space=sflag, size = 0x8, scoped, tag = 'scoped memory for tpu_custom_call.1']
    #allocation4 [shape = 's32[2]{0}', space=sflag, size = 0x8, scoped, tag = 'scoped memory for tpu_custom_call.1']
    #allocation5 [shape = 'u8[16384]{0}', space=vmem, size = 0x4000, scoped, tag = 'input window, operand 1']
    #allocation6 [shape = 's32[2]{0}', space=sflag, size = 0x8, scoped, tag = 'scoped memory for tpu_custom_call.1']
    #allocation7 [shape = 'u8[2048]{0}', space=vmem, size = 0x800, scoped, tag = 'output window, operand 0']
    %7 = vsyncpa [#allocation3], 0
    %s8 = scalar_lea.sflag [#allocation3], 1
    %9 = vsyncpa %s8, 0
    %10 = vsyncpa [#allocation6], 0
    %s11 = scalar_lea.sflag [#allocation6], 1
    %12 = vsyncpa %s11, 0
    %13 = vsyncpa [#allocation4], 0
    %s14 = scalar_lea.sflag [#allocation4], 1
    %15 = vsyncpa %s14, 0
    loop: start=0, step=1, limit=4
    $region2: #{tpu_custom_call.1} parent=1 // loop_pre_header
      _
    $region3: #{tpu_custom_call.1} parent=1 // loop_header
      %s17 = sphi 0, %s21
      %p18 = scmp.ge.s32.totalorder %s17, 4
      %s27 = sphi 0, %s29
      %s30 = sphi 0, %s27
      %s31 = sphi 0, %s30
      %s47 = sphi 0, %s31
      %s53 = sphi 0, %s55
      %s56 = sphi 0, %s53
      %s57 = sphi 0, %s56
      %s73 = sphi 0, %s57
      %s79 = sphi 0, %s81
      %s82 = sphi 0, %s79
      %s83 = sphi 0, %s82
      %s99 = sphi 0, %s83
    $region4: #{tpu_custom_call.1} parent=1 // loop_header_branch
      %20 = sbr.rel (%p18) target = $region8
    $region5: #{tpu_custom_call.1} parent=1 // loop_body
      %s22 = ssub.s32 %s17, 1
      %s23 = ssub.s32 %s17, 2
      %s24 = sadd.s32 %s17, 1
      %s25 = ssub.s32 %s17, %s24
      %p26 = scmp.eq.s32.totalorder %s25, 0
      %s28 = sadd.s32 %s27, 1
      %s29 = scalar_select %p26, %s27, %s28
      %p32 = pneg %p26
      %p33 = scmp.eq.s32.totalorder %s17, 1
      %p34 = por %p32, %p33
      %p35 = scmp.ne.s32.totalorder %s27, %s30
      %p36 = scmp.eq.s32.totalorder %s17, 0
      %p37 = por %p35, %p36
      %p38 = scmp.ne.s32.totalorder %s27, %s30
      %p39 = scmp.eq.s32.totalorder %s22, 1
      %p40 = por %p38, %p39
      %p41 = scmp.ne.s32.totalorder %s30, %s31
      %p42 = scmp.eq.s32.totalorder %s22, 0
      %p43 = por %p41, %p42
      %p44 = scmp.ne.s32.totalorder %s30, %s31
      %p45 = scmp.eq.s32.totalorder %s23, 1
      %p46 = por %p44, %p45
      %p48 = scmp.ne.s32.totalorder %s31, %s47
      %p49 = scmp.eq.s32.totalorder %s23, 0
      %p50 = por %p48, %p49
      %s51 = ssub.s32 %s17, %s24
      %p52 = scmp.eq.s32.totalorder %s51, 0
      %s54 = sadd.s32 %s53, 1
      %s55 = scalar_select %p52, %s53, %s54
      %p58 = pneg %p52
      %p59 = scmp.eq.s32.totalorder %s17, 1
      %p60 = por %p58, %p59
      %p61 = scmp.ne.s32.totalorder %s53, %s56
      %p62 = scmp.eq.s32.totalorder %s17, 0
      %p63 = por %p61, %p62
      %p64 = scmp.ne.s32.totalorder %s53, %s56
      %p65 = scmp.eq.s32.totalorder %s22, 1
      %p66 = por %p64, %p65
      %p67 = scmp.ne.s32.totalorder %s56, %s57
      %p68 = scmp.eq.s32.totalorder %s22, 0
      %p69 = por %p67, %p68
      %p70 = scmp.ne.s32.totalorder %s56, %s57
      %p71 = scmp.eq.s32.totalorder %s23, 1
      %p72 = por %p70, %p71
      %p74 = scmp.ne.s32.totalorder %s57, %s73
      %p75 = scmp.eq.s32.totalorder %s23, 0
      %p76 = por %p74, %p75
      %s77 = ssub.s32 %s17, %s24
      %p78 = scmp.eq.s32.totalorder %s77, 0
      %s80 = sadd.s32 %s79, 1
      %s81 = scalar_select %p78, %s79, %s80
      %p84 = pneg %p78
      %p85 = scmp.eq.s32.totalorder %s17, 1
      %p86 = por %p84, %p85
      %p87 = scmp.ne.s32.totalorder %s79, %s82
      %p88 = scmp.eq.s32.totalorder %s17, 0
      %p89 = por %p87, %p88
      %p90 = scmp.ne.s32.totalorder %s79, %s82
      %p91 = scmp.eq.s32.totalorder %s22, 1
      %p92 = por %p90, %p91
      %p93 = scmp.ne.s32.totalorder %s82, %s83
      %p94 = scmp.eq.s32.totalorder %s22, 0
      %p95 = por %p93, %p94
      %p96 = scmp.ne.s32.totalorder %s82, %s83
      %p97 = scmp.eq.s32.totalorder %s23, 1
      %p98 = por %p96, %p97
      %p100 = scmp.ne.s32.totalorder %s83, %s99
      %p101 = scmp.eq.s32.totalorder %s23, 0
      %p102 = por %p100, %p101
      %p103 = scmp.le.s32.totalorder 1, %s17
      %p104 = scmp.lt.s32.totalorder %s17, 3
      %p105 = pnand %p103, %p104
      %p106 = pneg %p105
      // Predicated region
      $region9: #{tpu_custom_call.1} parent=5 // pred_check
        _
      $region10: #{tpu_custom_call.1} parent=5 // pred_check_branch
        %108 = sbr.rel (%p105) target = $region12
      $region11: #{tpu_custom_call.1} parent=5 // pred_region
        %s109 = ssub.s32 %s17, 1
      $region12: #{tpu_custom_call.1} parent=5 // pred_fallthru
        _
      %p110 = scmp.lt.s32.totalorder %s17, 2
      // Predicated region
      $region13: #{tpu_custom_call.1} parent=5 // pred_check
        %p111 = pneg %p110
      $region14: #{tpu_custom_call.1} parent=5 // pred_check_branch
        %113 = sbr.rel (%p111) target = $region16
      $region15: #{tpu_custom_call.1} parent=5 // pred_region
        // Predicated region
        $region17: #{tpu_custom_call.1} parent=15 // pred_check
          %p114 = pneg %p37
        $region18: #{tpu_custom_call.1} parent=15 // pred_check_branch
          %116 = sbr.rel (%p114) target = $region20
        $region19: #{tpu_custom_call.1} parent=15 // pred_region
          %s117 = sand.u32 %s27, 1
          %s118 = scalar_lea.sflag [#allocation3], %s117
          %s119 = sand.u32 %s27, 1
          %s120 = smul.addr %s119, 16
          %s121 = scalar_lea.vmem [#allocation2], %s120
          %s122 = smul.u32 2, %s17
          %s124 = ssub.s32 256, 256
          %125 = vsyncadd %s118, %s124
          %s126 = smul.addr %s122, 128
          %s127 = scalar_lea.hbm %s0, %s126
          %s128 = sshll.u32 %s121, 4
          %s129 = int_to_ptr.vmem [resolvable:$true] %s128
          %134 = dma.hbm_to_vmem [thread:$0]  %s127, 256, %s129, %s118, 128, 128, 8
        $region20: #{tpu_custom_call.1} parent=15 // pred_fallthru
          _
        // Predicated region
        $region21: #{tpu_custom_call.1} parent=15 // pred_check
          %p135 = pneg %p63
        $region22: #{tpu_custom_call.1} parent=15 // pred_check_branch
          %137 = sbr.rel (%p135) target = $region24
        $region23: #{tpu_custom_call.1} parent=15 // pred_region
          %s138 = sand.u32 %s53, 1
          %s139 = scalar_lea.sflag [#allocation6], %s138
          %s140 = sand.u32 %s53, 1
          %s141 = smul.addr %s140, 16
          %s142 = scalar_lea.vmem [#allocation5], %s141
          %s143 = smul.u32 2, %s17
          %s145 = ssub.s32 256, 256
          %146 = vsyncadd %s139, %s145
          %s147 = smul.addr %s143, 128
          %s148 = scalar_lea.hbm %s1, %s147
          %s149 = sshll.u32 %s142, 4
          %s150 = int_to_ptr.vmem [resolvable:$true] %s149
          %155 = dma.hbm_to_vmem [thread:$0]  %s148, 256, %s150, %s139, 128, 128, 8
        $region24: #{tpu_custom_call.1} parent=15 // pred_fallthru
          _
      $region16: #{tpu_custom_call.1} parent=5 // pred_fallthru
        _
      %p156 = scmp.le.s32.totalorder 1, %s17
      %p157 = scmp.lt.s32.totalorder %s17, 3
      %p158 = pnand %p156, %p157
      %p159 = pneg %p158
      // Predicated region
      $region25: #{tpu_custom_call.1} parent=5 // pred_check
        _
      $region26: #{tpu_custom_call.1} parent=5 // pred_check_branch
        %161 = sbr.rel (%p158) target = $region28
      $region27: #{tpu_custom_call.1} parent=5 // pred_region
        %s162 = ssub.s32 %s17, 1
        %s163 = sand.u32 %s30, 1
        %s164 = scalar_lea.sflag [#allocation3], %s163
        %s165 = sand.u32 %s30, 1
        %s166 = smul.addr %s165, 16
        %s167 = scalar_lea.vmem [#allocation2], %s166
        // Predicated region
        $region29: #{tpu_custom_call.1} parent=27 // pred_check
          %p168 = pneg %p43
        $region30: #{tpu_custom_call.1} parent=27 // pred_check_branch
          %170 = sbr.rel (%p168) target = $region32
        $region31: #{tpu_custom_call.1} parent=27 // pred_region
          %171 = dma.done %s164, 256
        $region32: #{tpu_custom_call.1} parent=27 // pred_fallthru
          _
        %s172 = sand.u32 %s56, 1
        %s173 = scalar_lea.sflag [#allocation6], %s172
        %s174 = sand.u32 %s56, 1
        %s175 = smul.addr %s174, 16
        %s176 = scalar_lea.vmem [#allocation5], %s175
        // Predicated region
        $region33: #{tpu_custom_call.1} parent=27 // pred_check
          %p177 = pneg %p69
        $region34: #{tpu_custom_call.1} parent=27 // pred_check_branch
          %179 = sbr.rel (%p177) target = $region36
        $region35: #{tpu_custom_call.1} parent=27 // pred_region
          %180 = dma.done %s173, 256
        $region36: #{tpu_custom_call.1} parent=27 // pred_fallthru
          _
        %s181 = sand.u32 %s30, 1
        %s182 = scalar_lea.sflag [#allocation3], %s181
        %s183 = sand.u32 %s30, 1
        %s184 = smul.addr %s183, 16
        %s185 = scalar_lea.vmem [#allocation2], %s184
        %p186 = pneg %p43
        %p187 = pneg %p40
        %s188 = sand.u32 %s56, 1
        %s189 = scalar_lea.sflag [#allocation6], %s188
        %s190 = sand.u32 %s56, 1
        %s191 = smul.addr %s190, 16
        %s192 = scalar_lea.vmem [#allocation5], %s191
        %p193 = pneg %p69
        %p194 = pneg %p66
        %p195 = pneg %p95
        %p196 = pneg %p92
        %s197 = sand.u32 %s82, 1
        %s198 = scalar_lea.sflag [#allocation4], %s197
        %s199 = sand.u32 %s82, 1
        %s200 = smul.addr %s199, 2
        %s201 = scalar_lea.vmem [#allocation7], %s200
        %s202 = smul.u32 2, %s22
        %s203 = smul.u32 2, %s22
        %v204 = vld [vmem:[%s167] sm:$0xff]
        %v205 = vld [vmem:[%s167 + $0x8] sm:$0xff]
        %v206 = vld [vmem:[%s176] sm:$0xff]
        %v207 = vld [vmem:[%s176 + $0x8] sm:$0xff]
        %208 = vrot.lane.b32.xlu0 %v204, 127
        %v209 = vpop.permute.xlu0 %208
        %210 = vrot.lane.b32.xlu0 %v205, 127
        %v211 = vpop.permute.xlu0 %210
        %212 = vrot.lane.b32.xlu0 %v204, 126
        %v213 = vpop.permute.xlu0 %212
        %214 = vrot.lane.b32.xlu0 %v205, 126
        %v215 = vpop.permute.xlu0 %214
        %216 = vrot.lane.b32.xlu0 %v204, 125
        %v217 = vpop.permute.xlu0 %216
        %218 = vrot.lane.b32.xlu0 %v205, 125
        %v219 = vpop.permute.xlu0 %218
        %220 = vrot.lane.b32.xlu0 %v206, 127
        %v221 = vpop.permute.xlu0 %220
        %222 = vrot.lane.b32.xlu0 %v207, 127
        %v223 = vpop.permute.xlu0 %222
        %224 = vrot.lane.b32.xlu0 %v206, 126
        %v225 = vpop.permute.xlu0 %224
        %226 = vrot.lane.b32.xlu0 %v207, 126
        %v227 = vpop.permute.xlu0 %226
        %228 = vrot.lane.b32.xlu0 %v206, 125
        %v229 = vpop.permute.xlu0 %228
        %230 = vrot.lane.b32.xlu0 %v207, 125
        %v231 = vpop.permute.xlu0 %230
        %v232 = vmax.f32 %v204, %v209
        %v233 = vmax.f32 %v205, %v211
        %v234 = vmax.f32 %v232, %v213
        %v235 = vmax.f32 %v233, %v215
        %v236 = vsub.f32 %v204, %v234
        %v237 = vsub.f32 %v205, %v235
        %v238 = vmul.f32 %v236, 1.442695
        %v239 = vpow.pop %v238
        %v240 = vmul.f32 %v237, 1.442695
        %v241 = vpow.pop %v240
        %v242 = vsub.f32 %v209, %v234
        %v243 = vsub.f32 %v211, %v235
        %v244 = vmul.f32 %v242, 1.442695
        %v245 = vpow.pop %v244
        %v246 = vmul.f32 %v243, 1.442695
        %v247 = vpow.pop %v246
        %v248 = vsub.f32 %v213, %v234
        %v249 = vsub.f32 %v215, %v235
        %v250 = vmul.f32 %v248, 1.442695
        %v251 = vpow.pop %v250
        %v252 = vmul.f32 %v249, 1.442695
        %v253 = vpow.pop %v252
        %v254 = vadd.f32 %v239, %v245
        %v255 = vadd.f32 %v241, %v247
        %v256 = vadd.f32 %v254, %v251
        %v257 = vadd.f32 %v255, %v253
        %v258 = vlog2.pop %v256
        %v259 = vmul.f32 %v258, 0.6931472
        %v260 = vlog2.pop %v257
        %v261 = vmul.f32 %v260, 0.6931472
        %v262 = vadd.f32 %v234, %v259
        %v263 = vadd.f32 %v235, %v261
        %v264 = vsub.f32 %v204, %v262
        %v265 = vsub.f32 %v205, %v263
        %v266 = vmul.f32 %v206, %v264
        %v267 = vmul.f32 %v207, %v265
        %v268 = vsub.f32 %v209, %v262
        %v269 = vsub.f32 %v211, %v263
        %v270 = vmul.f32 %v221, %v268
        %v271 = vmul.f32 %v223, %v269
        %v272 = vadd.f32 %v266, %v270
        %v273 = vadd.f32 %v267, %v271
        %v274 = vsub.f32 %v213, %v262
        %v275 = vsub.f32 %v215, %v263
        %v276 = vmul.f32 %v225, %v274
        %v277 = vmul.f32 %v227, %v275
        %v278 = vadd.f32 %v272, %v276
        %v279 = vadd.f32 %v273, %v277
        %v280 = vsub.f32 0.0, %v278
        %v281 = vsub.f32 0.0, %v279
        %v282 = vsub.f32 %v217, %v229
        %v283 = vsub.f32 %v219, %v231
        %v284 = vmul.f32 %v282, %v282
        %v285 = vmul.f32 %v283, %v283
        %v286 = vlaneseq
        %v287 = vand.u32 %v286, 127
        %v288 = vand.u32 %v287, 3
        %vm289 = vcmp.eq.s32.totalorder %v288, 0
        %v290 = vsel %vm289, %v280, 0.0
        %v291 = vsel %vm289, %v281, 0.0
        %v292 = vsel %vm289, %v284, 0.0
        %v293 = vsel %vm289, %v285, 0.0
        %v294 = vadd.f32 %v290, %v291
        %v295 = vrot.slane %v294, 4
        %v296 = vadd.f32 %v294, %v295
        %v297 = vrot.slane %v296, 2
        %v298 = vadd.f32 %v296, %v297
        %v299 = vrot.slane %v298, 1
        %v300 = vadd.f32 %v298, %v299
        %301 = vst [vmem:[%s201] sm:$0x1] %v300
        %v302 = vadd.f32 %v292, %v293
        %v303 = vrot.slane %v302, 4
        %v304 = vadd.f32 %v302, %v303
        %v305 = vrot.slane %v304, 2
        %v306 = vadd.f32 %v304, %v305
        %v307 = vrot.slane %v306, 1
        %v308 = vadd.f32 %v306, %v307
        %309 = vst [vmem:[%s201 + $0x1] sm:$0x1] %v308
        %s310 = sand.u32 %s82, 1
        %s311 = scalar_lea.sflag [#allocation4], %s310
        %s312 = sand.u32 %s82, 1
        %s313 = smul.addr %s312, 2
        %s314 = scalar_lea.vmem [#allocation7], %s313
        // Predicated region
        $region37: #{tpu_custom_call.1} parent=27 // pred_check
          %p315 = pneg %p92
        $region38: #{tpu_custom_call.1} parent=27 // pred_check_branch
          %317 = sbr.rel (%p315) target = $region40
        $region39: #{tpu_custom_call.1} parent=27 // pred_region
          %s319 = ssub.s32 32, 32
          %320 = vsyncadd %s311, %s319
          %s321 = smul.addr %s22, 32
          %s322 = scalar_lea.hbm %s2, %s321
          %s324 = sshll.u32 %s314, 4
          %s325 = int_to_ptr.vmem [resolvable:$true] %s324
          %327 = dma.vmem_to_hbm [thread:$0]  %s325, 32, %s322, %s311
        $region40: #{tpu_custom_call.1} parent=27 // pred_fallthru
          _
      $region28: #{tpu_custom_call.1} parent=5 // pred_fallthru
        _
      %p328 = scmp.le.s32.totalorder 2, %s17
      // Predicated region
      $region41: #{tpu_custom_call.1} parent=5 // pred_check
        %p329 = pneg %p328
      $region42: #{tpu_custom_call.1} parent=5 // pred_check_branch
        %331 = sbr.rel (%p329) target = $region44
      $region43: #{tpu_custom_call.1} parent=5 // pred_region
        %s332 = ssub.s32 %s17, 2
        // Predicated region
        $region45: #{tpu_custom_call.1} parent=43 // pred_check
          %p333 = pneg %p98
        $region46: #{tpu_custom_call.1} parent=43 // pred_check_branch
          %335 = sbr.rel (%p333) target = $region48
        $region47: #{tpu_custom_call.1} parent=43 // pred_region
          %s336 = sand.u32 %s83, 1
          %s337 = scalar_lea.sflag [#allocation4], %s336
          %s338 = sand.u32 %s83, 1
          %s339 = smul.addr %s338, 2
          %s340 = scalar_lea.vmem [#allocation7], %s339
          %341 = dma.done %s337, 32
        $region48: #{tpu_custom_call.1} parent=43 // pred_fallthru
          _
      $region44: #{tpu_custom_call.1} parent=5 // pred_fallthru
        _
    $region6: #{tpu_custom_call.1} parent=1 // loop_footer
      %s21 = sadd.s32 1, %s17
    $region7: #{tpu_custom_call.1} parent=1 // loop_footer_branch
      %16 = sbr.rel target = $region3
    $region8: #{tpu_custom_call.1} parent=1 // loop_exit
      _
    %342 = vsyncpa [#allocation3], 1
    %s343 = scalar_lea.sflag [#allocation3], 1
    %344 = vsyncpa %s343, 1
    %345 = vsyncpa [#allocation6], 1
    %s346 = scalar_lea.sflag [#allocation6], 1
    %347 = vsyncpa %s346, 1
    %348 = vsyncpa [#allocation4], 1
    %s349 = scalar_lea.sflag [#allocation4], 1
    %350 = vsyncpa %s349, 1

</llo_original>
